<compile_context>
chip_gen: v5e
topology: v5e:2x2
jax: 0.10.0
libtpu: 0.0.40
codegen_flags: <defaults>
</compile_context>

<pallas_src>
import jax
import jax.numpy as jnp
from jax.experimental import pallas as pl
from jax.experimental.pallas import tpu as pltpu

_MIB = 1 << 20


def _vmem_capacity_bytes():
    try:
        return int(pltpu.get_tpu_info().vmem_capacity_bytes)
    except Exception:
        return 64 * _MIB  # conservative default (v7x-sized)


def _pick_tile(dim, cap, aligns):
    """Return (tile, padded_dim): tile divides padded_dim, tile <= max(cap, dim).

    If dim fits under the cap the full dimension is used (always a legal block
    shape).  Otherwise prefer the largest aligned divisor; if none exists, pad
    the dimension up to a multiple of the aligned cap so VMEM stays bounded."""
    if dim <= cap:
        return dim, dim
    for align in aligns:
        t = (cap // align) * align
        s = t
        while s >= align:
            if dim % s == 0:
                return s, dim
            s -= align
    align = aligns[-1]
    t = max((cap // align) * align, align)
    padded = ((dim + t - 1) // t) * t
    return t, padded


def _linear_kernel_1pass(a_ref, w_ref, b_ref, o_ref):
    # Whole K fits in one block: one MXU pass, bias add, store. No scratch.
    o_ref[...] = (
        jnp.dot(a_ref[...], w_ref[...], preferred_element_type=jnp.float32)
        + b_ref[...]
    ).astype(o_ref.dtype)


def _linear_kernel_kloop(a_ref, w_ref, b_ref, o_ref, acc_ref):
    # K-reduction accumulator: init at k==0, bias + store at k==last.
    @pl.when(pl.program_id(2) == 0)
    def _():
        acc_ref[...] = jnp.zeros_like(acc_ref)

    acc_ref[...] += jnp.dot(a_ref[...], w_ref[...],
                            preferred_element_type=jnp.float32)

    @pl.when(pl.program_id(2) == pl.num_programs(2) - 1)
    def _():
        o_ref[...] = (acc_ref[...] + b_ref[...]).astype(o_ref.dtype)


def linear(a, weight, bias):
    """out = a @ weight.T + bias  (torch.nn.functional.linear semantics)."""
    M, K = a.shape
    N, K2 = weight.shape
    assert K == K2 and bias.shape == (N,)

    vmem = _vmem_capacity_bytes()
    if vmem >= 100 * _MIB:          # v5e / v6e: 128 MiB physical VMEM
        tm_cap, tn_cap, tk_cap = 512, 1024, 1024
    else:                           # v7x (64 MiB) or unknown: stay conservative
        tm_cap, tn_cap, tk_cap = 256, 512, 512

    tm, Mp = _pick_tile(M, tm_cap, (8,))
    tn, Np = _pick_tile(N, tn_cap, (256, 128))
    tk, Kp = _pick_tile(K, tk_cap, (256, 128))

    # One-time, bandwidth-only transpose outside the kernel: canonical
    # (tm,tk)x(tk,tn) contraction on the MXU, no per-step XLU transpose.
    w_t = jnp.transpose(weight)          # (K, N)
    bias2 = bias.reshape(1, N)

    # Zero-pad awkward dims (zero rows/cols contribute nothing to the matmul).
    if (Mp, Kp) != (M, K):
        a = jnp.pad(a, ((0, Mp - M), (0, Kp - K)))
    if (Kp, Np) != (K, N):
        w_t = jnp.pad(w_t, ((0, Kp - K), (0, Np - N)))
    if Np != N:
        bias2 = jnp.pad(bias2, ((0, 0), (0, Np - N)))

    gm, gn, gk = Mp // tm, Np // tn, Kp // tk
    single_k = gk == 1

    # Double-buffered input/output tiles (+ f32 accumulator on the K-loop path).
    footprint = 4 * (2 * (tm * tk + tk * tn + tn) + 2 * tm * tn
                     + (0 if single_k else tm * tn))
    vmem_limit = int(min(max(2 * footprint + 8 * _MIB, 32 * _MIB),
                         max(vmem - 16 * _MIB, 32 * _MIB)))

    cost = pl.CostEstimate(
        flops=2 * M * N * K,
        transcendentals=0,
        # Account for re-streaming: A read gn times, W read gm times.
        bytes_accessed=4 * (Mp * Kp * gn + Kp * Np * gm + Mp * Np + Np),
    )

    if single_k:
        kernel = _linear_kernel_1pass
        grid_spec = pltpu.PrefetchScalarGridSpec(
            num_scalar_prefetch=0,
            grid=(gm, gn),
            in_specs=[
                pl.BlockSpec((tm, tk), lambda i, j: (i, 0)),   # A rows tile
                pl.BlockSpec((tk, tn), lambda i, j: (0, j)),   # W^T cols tile
                pl.BlockSpec((1, tn), lambda i, j: (0, j)),    # bias row slice
            ],
            out_specs=pl.BlockSpec((tm, tn), lambda i, j: (i, j)),
        )
        dims = ("parallel", "parallel")
    else:
        kernel = _linear_kernel_kloop
        grid_spec = pltpu.PrefetchScalarGridSpec(
            num_scalar_prefetch=0,
            grid=(gm, gn, gk),
            in_specs=[
                pl.BlockSpec((tm, tk), lambda i, j, k: (i, k)),
                pl.BlockSpec((tk, tn), lambda i, j, k: (k, j)),
                pl.BlockSpec((1, tn), lambda i, j, k: (0, j)),
            ],
            out_specs=pl.BlockSpec((tm, tn), lambda i, j, k: (i, j)),
            scratch_shapes=[pltpu.VMEM((tm, tn), jnp.float32)],
        )
        dims = ("parallel", "parallel", "arbitrary")

    out = pl.pallas_call(
        kernel,
        out_shape=jax.ShapeDtypeStruct((Mp, Np), a.dtype),
        grid_spec=grid_spec,
        compiler_params=pltpu.CompilerParams(
            dimension_semantics=dims,
            vmem_limit_bytes=vmem_limit,
        ),
        cost_estimate=cost,
    )(a, w_t, bias2)

    if (Mp, Np) != (M, N):
        out = out[:M, :N]
    return out


def _reference(a, weight, bias):
    return a @ weight.T + bias


if __name__ == "__main__":
    key = jax.random.PRNGKey(0)
    ka, kw, kb = jax.random.split(key, 3)

    # Model3(n=128, k=64) applied to a small batch of 16 rows.
    M, K, N = 16, 64, 128
    a = jax.random.normal(ka, (M, K), dtype=jnp.float32)
    weight = jax.random.normal(kw, (N, K), dtype=jnp.float32)
    bias = jax.random.normal(kb, (N,), dtype=jnp.float32)

    out = linear(a, weight, bias)
    jax.block_until_ready(out)

    ref = _reference(a, weight, bias)
    assert out.shape == (M, N)
    assert jnp.allclose(out, ref, atol=1e-4, rtol=1e-4), "mismatch vs reference"

    print("KERNEL_OK")
</pallas_src>

<mosaic_0001>
module attributes {stable_mosaic.version = 11 : i64} {
  func.func @_linear_kernel_1pass(%arg0: i32, %arg1: i32, %arg2: memref<16x64xf32, #tpu.memory_space<vmem>>, %arg3: memref<64x128xf32, #tpu.memory_space<vmem>>, %arg4: memref<1x128xf32, #tpu.memory_space<vmem>>, %arg5: memref<16x128xf32, #tpu.memory_space<vmem>>) attributes {dimension_semantics = [#tpu.dimension_semantics<parallel>, #tpu.dimension_semantics<parallel>], iteration_bounds = array<i64: 1, 1>, scalar_prefetch = 0 : i64, scratch_operands = 0 : i64, tpu.core_type = #tpu.core_type<tc>, window_params = [{transform_indices = @transform_0, window_bounds = array<i64: 16, 64>}, {transform_indices = @transform_1, window_bounds = array<i64: 64, 128>}, {transform_indices = @transform_2, window_bounds = array<i64: 1, 128>}, {transform_indices = @transform_3, window_bounds = array<i64: 16, 128>}]} {
    %c0 = arith.constant 0 : index
    %c0_0 = arith.constant 0 : index
    %0 = vector.load %arg2[%c0, %c0_0] : memref<16x64xf32, #tpu.memory_space<vmem>>, vector<16x64xf32>
    %c0_1 = arith.constant 0 : index
    %c0_2 = arith.constant 0 : index
    %1 = vector.load %arg3[%c0_1, %c0_2] : memref<64x128xf32, #tpu.memory_space<vmem>>, vector<64x128xf32>
    %cst = arith.constant dense<0.000000e+00> : vector<16x128xf32>
    %2 = tpu.matmul %0, %1, %cst {dimension_numbers = #tpu.dot_dimension_numbers<[1], [0], [0], [1], [0, 0, 1, 1], [], []>} : vector<16x64xf32>, vector<64x128xf32>, vector<16x128xf32> -> vector<16x128xf32>
    %c0_3 = arith.constant 0 : index
    %c0_4 = arith.constant 0 : index
    %3 = vector.load %arg4[%c0_3, %c0_4] : memref<1x128xf32, #tpu.memory_space<vmem>>, vector<1x128xf32>
    %4 = vector.broadcast %3 : vector<1x128xf32> to vector<16x128xf32>
    %5 = arith.addf %2, %4 : vector<16x128xf32>
    %c0_5 = arith.constant 0 : index
    %c0_6 = arith.constant 0 : index
    %6 = vector.load %arg5[%c0_5, %c0_6] : memref<16x128xf32, #tpu.memory_space<vmem>>, vector<16x128xf32>
    tpu.vector_store %arg5[%c0_5, %c0_6], %5 {strides = array<i32>} : memref<16x128xf32, #tpu.memory_space<vmem>>, vector<16x128xf32>,
    return
  }
  func.func @transform_0(%arg0: i32, %arg1: i32) -> (i32, i32) {
    %c0_i32 = arith.constant 0 : i32
    %c0_i32_0 = arith.constant 0 : i32
    return %arg0, %c0_i32 : i32, i32
  }
  func.func @transform_1(%arg0: i32, %arg1: i32) -> (i32, i32) {
    %c0_i32 = arith.constant 0 : i32
    %c0_i32_0 = arith.constant 0 : i32
    return %c0_i32, %arg1 : i32, i32
  }
  func.func @transform_2(%arg0: i32, %arg1: i32) -> (i32, i32) {
    %c0_i32 = arith.constant 0 : i32
    %c0_i32_0 = arith.constant 0 : i32
    return %c0_i32, %arg1 : i32, i32
  }
  func.func @transform_3(%arg0: i32, %arg1: i32) -> (i32, i32) {
    %c0_i32 = arith.constant 0 : i32
    return %arg0, %arg1 : i32, i32
  }
}

</mosaic_0001>

<llo_original>
// kernel: tpu_custom_call.1
$region0: #{tpu_custom_call.1}
  #allocation0 [shape = 'u32[]', space=smem, size = 0x4, offset = 0x4, fixed_abs, tag = 'smem constant byte address 0x4 - core index']
  #allocation1 [shape = 'u32[72,128]{1,0:T(1,128)}', space=vmem, size = 0x9000, scoped, tag = 'internal scratch']
  %s0 = inlined_call_operand.hbm [shape: f32[16,64], index: 0, kind: input, shape index: {}]
  %s1 = inlined_call_operand.hbm [shape: f32[64,128], index: 1, kind: input, shape index: {}]
  %s2 = inlined_call_operand.vmem [shape: f32[1,128], index: 2, kind: input, shape index: {}]
  %s3 = inlined_call_operand.hbm [shape: f32[16,128], index: 3, kind: output, shape index: {}]
  %s4 = sld [smem:[#allocation0]]
  $region30: #{tpu_custom_call.1} parent=0
    _
  %s6 = ssub.s32 1, %s4
  %s7 = scalar_select 0, %s6, %s4
  $region1: #{tpu_custom_call.1} parent=0
    #allocation2 [shape = 'u8[8192]{0}', space=vmem, size = 0x2000, scoped, tag = 'input window, operand 0, single buffered']
    #allocation3 [shape = 's32[1]{0}', space=sflag, size = 0x4, scoped, tag = 'scoped memory for tpu_custom_call.1']
    #allocation4 [shape = 's32[1]{0}', space=sflag, size = 0x4, scoped, tag = 'scoped memory for tpu_custom_call.1']
    #allocation5 [shape = 'u8[32768]{0}', space=vmem, size = 0x8000, scoped, tag = 'input window, operand 1, single buffered']
    #allocation6 [shape = 's32[1]{0}', space=sflag, size = 0x4, scoped, tag = 'scoped memory for tpu_custom_call.1']
    #allocation7 [shape = 'u8[8192]{0}', space=vmem, size = 0x2000, scoped, tag = 'output window, operand 0, single buffered']
    %8 = vsyncpa [#allocation3], 0
    %9 = vsyncpa [#allocation6], 0
    %10 = vsyncpa [#allocation4], 0
    // Predicated region
    $region2: #{tpu_custom_call.1} parent=1 // pred_check
      _
    $region3: #{tpu_custom_call.1} parent=1 // pred_check_branch
      %12 = sbr.rel (0) target = $region5
    $region4: #{tpu_custom_call.1} parent=1 // pred_region
      %14 = vsyncadd [#allocation3], 0
      %s15 = sshll.u32 %s0, 4
      %s16 = int_to_ptr.hbm [resolvable:$true] %s15
      %s17 = sshll.u32 [#allocation2], 4
      %s18 = int_to_ptr.vmem [resolvable:$true] %s17
      %23 = dma.hbm_to_vmem [thread:$0]  %s16, 256, %s18, [#allocation3], 128, 128, 8
    $region5: #{tpu_custom_call.1} parent=1 // pred_fallthru
      _
    // Predicated region
    $region6: #{tpu_custom_call.1} parent=1 // pred_check
      _
    $region7: #{tpu_custom_call.1} parent=1 // pred_check_branch
      %25 = sbr.rel (0) target = $region9
    $region8: #{tpu_custom_call.1} parent=1 // pred_region
      %27 = vsyncadd [#allocation6], 0
      %s28 = sshll.u32 %s1, 4
      %s29 = int_to_ptr.hbm [resolvable:$true] %s28
      %s30 = sshll.u32 [#allocation5], 4
      %s31 = int_to_ptr.vmem [resolvable:$true] %s30
      %36 = dma.hbm_to_vmem [thread:$0]  %s29, 1024, %s31, [#allocation6], 128, 128, 8
    $region9: #{tpu_custom_call.1} parent=1 // pred_fallthru
      _
    // Predicated region
    $region10: #{tpu_custom_call.1} parent=1 // pred_check
      _
    $region11: #{tpu_custom_call.1} parent=1 // pred_check_branch
      %38 = sbr.rel (0) target = $region13
    $region12: #{tpu_custom_call.1} parent=1 // pred_region
      _
    $region13: #{tpu_custom_call.1} parent=1 // pred_fallthru
      _
    // Predicated region
    $region14: #{tpu_custom_call.1} parent=1 // pred_check
      _
    $region15: #{tpu_custom_call.1} parent=1 // pred_check_branch
      %40 = sbr.rel (0) target = $region17
    $region16: #{tpu_custom_call.1} parent=1 // pred_region
      %42 = dma.done [#allocation3], 256
    $region17: #{tpu_custom_call.1} parent=1 // pred_fallthru
      _
    // Predicated region
    $region18: #{tpu_custom_call.1} parent=1 // pred_check
      _
    $region19: #{tpu_custom_call.1} parent=1 // pred_check_branch
      %44 = sbr.rel (0) target = $region21
    $region20: #{tpu_custom_call.1} parent=1 // pred_region
      %46 = dma.done [#allocation6], 1024
    $region21: #{tpu_custom_call.1} parent=1 // pred_fallthru
      _
    %v47 = vld [vmem:[#allocation2] sm:$0xff]
    %v48 = vld [vmem:[#allocation2 + $0x8] sm:$0xff]
    %v49 = vld [vmem:[#allocation5] sm:$0xff]
    %v50 = vld [vmem:[#allocation5 + $0x8] sm:$0xff]
    %v51 = vld [vmem:[#allocation5 + $0x10] sm:$0xff]
    %v52 = vld [vmem:[#allocation5 + $0x18] sm:$0xff]
    %v53 = vld [vmem:[#allocation5 + $0x20] sm:$0xff]
    %v54 = vld [vmem:[#allocation5 + $0x28] sm:$0xff]
    %v55 = vld [vmem:[#allocation5 + $0x30] sm:$0xff]
    %v56 = vld [vmem:[#allocation5 + $0x38] sm:$0xff]
    %v57 = vld [vmem:[%s2] sm:$0x1]
    %v59 = vperm.slane %v57, 0
    %vm61 = vcmask 523264
    %v63 = vsel %vm61, %v47, 0
    %v66 = vsel %vm61, %v48, 0
    %68 = vmatpush.msra.mxu0 0.0
    %69 = vmatpush.msra.mxu0 0.0
    %70 = vmatpush.msra.mxu0 0.0
    %71 = vmatpush.msra.mxu0 0.0
    %72 = vmatpush.msra.mxu0 0.0
    %73 = vmatpush.msra.mxu0 0.0
    %74 = vmatpush.msra.mxu0 0.0
    %75 = vmatpush.msra.mxu0 0.0
    %76 = vmatpush.msra.mxu0 %v56
    %77 = vmatpush.msra.mxu0 %v55
    %78 = vmatpush.msra.mxu0 %v54
    %79 = vmatpush.msra.mxu0 %v53
    %80 = vmatpush.msra.mxu0 %v52
    %81 = vmatpush.msra.mxu0 %v51
    %82 = vmatpush.msra.mxu0 %v50
    %83 = vmatpush.msra.mxu0 %v49
    %84 = vmatmul.f32.gmra.mxu0 %v63
    %v85 = vpop.f32.mrf.mxu0
    %v86 = vadd.f32 %v59, %v85
    %87 = vmatmul.f32.gmra.mxu0 %v66
    %v88 = vpop.f32.mrf.mxu0
    %v89 = vadd.f32 %v59, %v88
    %90 = vdwg.mxu0
    %91 = vst [vmem:[#allocation7] sm:$0xff] %v86
    %92 = vst [vmem:[#allocation7 + $0x8] sm:$0xff] %v89
    // Predicated region
    $region22: #{tpu_custom_call.1} parent=1 // pred_check
      _
    $region23: #{tpu_custom_call.1} parent=1 // pred_check_branch
      %94 = sbr.rel (0) target = $region25
    $region24: #{tpu_custom_call.1} parent=1 // pred_region
      %96 = vsyncadd [#allocation4], 0
      %s97 = sshll.u32 [#allocation7], 4
      %s98 = int_to_ptr.vmem [resolvable:$true] %s97
      %s99 = sshll.u32 %s3, 4
      %s100 = int_to_ptr.hbm [resolvable:$true] %s99
      %105 = dma.vmem_to_hbm [thread:$0]  %s98, 256, %s100, [#allocation4], 128, 128, 8
    $region25: #{tpu_custom_call.1} parent=1 // pred_fallthru
      _
    // Predicated region
    $region26: #{tpu_custom_call.1} parent=1 // pred_check
      _
    $region27: #{tpu_custom_call.1} parent=1 // pred_check_branch
      %107 = sbr.rel (0) target = $region29
    $region28: #{tpu_custom_call.1} parent=1 // pred_region
      %109 = dma.done [#allocation4], 256
    $region29: #{tpu_custom_call.1} parent=1 // pred_fallthru
      _
    %110 = vsyncpa [#allocation3], 1
    %111 = vsyncpa [#allocation6], 1
    %112 = vsyncpa [#allocation4], 1

</llo_original>
